<compile_context>
chip_gen: v7x
topology: tpu7x:2x2x1
jax: 0.10.0
libtpu: 0.0.40
codegen_flags: <defaults>
</compile_context>

<pallas_src>
import math
import numpy as np
import jax
import jax.numpy as jnp
from jax.experimental import pallas as pl
from jax.experimental.pallas import tpu as pltpu

# ------------------------- configuration -------------------------
C_IN = 32            # input channel dim fed to Operation
MUL_MID = 4          # mul_mid
D1 = 4               # dim(Rs_mid_1) = 1 + 3
D2 = 4               # dim(Rs_mid_2) = 1 + 3
K_OUT = 11           # dim(Multiplication.Rs_out) = 1 + 3 + 3 + 1 + 3
D_OUT = 16           # dim(Rs_out) = 4*(1) + 4*(3)
UD = MUL_MID * D1 * D2           # 64  folded outer-product width per logical row

PACK = 8                         # logical rows packed per lane-dense physical row
PK_IN = PACK * C_IN              # 256  packed input width  (2 x 128 lanes)
PK_AB = PACK * UD                # 512  packed a/b width    (4 x 128 lanes)
PK_OUT = PACK * D_OUT            # 128  packed output width (1 x 128 lanes)
TBP = 2048                       # packed-row tile (= 16384 logical rows); sweep 1024-4096


# ------------------------- parameter / constant setup (host-side glue) -------------------------
def build_cg():
    """Full CG tensor C[k, i, j] for Rs_mid_1 x Rs_mid_2 -> Rs_m_out (l<=1 only)."""
    C = np.zeros((K_OUT, D1, D2), np.float32)
    C[0, 0, 0] = 1.0                                    # (0,0)->0
    for m in range(3):
        C[1 + m, 0, 1 + m] = 1.0                        # (0,1)->1
        C[4 + m, 1 + m, 0] = 1.0                        # (1,0)->1
        C[7, 1 + m, 1 + m] = 1.0 / math.sqrt(3.0)       # (1,1)->0
    eps = np.zeros((3, 3, 3), np.float32)
    eps[0, 1, 2] = eps[1, 2, 0] = eps[2, 0, 1] = 1.0
    eps[0, 2, 1] = eps[2, 1, 0] = eps[1, 0, 2] = -1.0
    C[8:11, 1:4, 1:4] = eps / math.sqrt(2.0)            # (1,1)->1
    # TODO(synk): (1,1)->2 path skipped via get_l_mul (l<=1); general Wigner-3j not built here.
    return C


def build_structured(Cfull, W0, W1):
    """E1/E2 (outer-product expanders), block-diag CG matrix, SelfInteraction weight."""
    U, d1, d2, K = MUL_MID, D1, D2, K_OUT
    E1 = np.zeros((U * d1, U * d1 * d2), np.float32)
    E2 = np.zeros((U * d2, U * d1 * d2), np.float32)
    Cb = np.zeros((U * d1 * d2, U * K), np.float32)
    for u in range(U):
        for i in range(d1):
            for j in range(d2):
                col = u * d1 * d2 + i * d2 + j
                E1[u * d1 + i, col] = 1.0
                E2[u * d2 + j, col] = 1.0
                for k in range(K):
                    Cb[col, u * K + k] = Cfull[k, i, j]

    blocks = [(0, 0), (1, 1), (1, 4), (0, 7), (1, 8)]   # (l, offset) within one mul copy
    scalars, vectors = [], []
    for u in range(U):
        for (l, off) in blocks:
            (scalars if l == 0 else vectors).append(u * K + off)
    n0, n1 = len(scalars), len(vectors)                 # 8, 12

    Wsi = np.zeros((U * K, D_OUT), np.float32)
    for v in range(4):
        for c, pos in enumerate(scalars):
            Wsi[pos, v] = W0[v, c] / math.sqrt(n0)
    for v in range(4):
        for c, pos in enumerate(vectors):
            for m in range(3):
                Wsi[pos + m, 4 + v * 3 + m] = W1[v, c] / math.sqrt(n1)
    return E1, E2, Cb, Wsi


def init_params(key):
    k1, k2, k3, k4 = jax.random.split(key, 4)
    W1op = np.asarray(jax.random.normal(k1, (C_IN, MUL_MID * D1), jnp.float32)) / math.sqrt(C_IN)
    W2op = np.asarray(jax.random.normal(k2, (C_IN, MUL_MID * D2), jnp.float32)) / math.sqrt(C_IN)
    W0 = np.asarray(jax.random.normal(k3, (4, 8), jnp.float32))    # SI l=0 mixing
    W1 = np.asarray(jax.random.normal(k4, (4, 12), jnp.float32))   # SI l=1 mixing
    Cfull = build_cg()
    E1, E2, Cb, Wsi = build_structured(Cfull, W0, W1)

    # ---- constant-fold the structured matrices into the weights (exact up to fp reassoc) ----
    W1E1 = W1op @ E1                                   # [32, 64]  (entries == W1op entries)
    W2E2 = W2op @ E2                                   # [32, 64]
    CbWsi = Cb @ Wsi                                   # [64, 16]

    # ---- 8-row lane-dense packing: block-diagonalise the folded weights host-side ----
    # W12_blk: [256, 1024]; columns [0:512) hold the 8 'a' blocks, [512:1024) the 8 'b' blocks.
    # CbWsi_blk: [512, 128]; row-block r -> output columns [16r:16r+16).
    W12_blk = np.zeros((PK_IN, 2 * PK_AB), np.float32)
    CbWsi_blk = np.zeros((PK_AB, PK_OUT), np.float32)
    for r in range(PACK):
        W12_blk[r * C_IN:(r + 1) * C_IN, r * UD:(r + 1) * UD] = W1E1
        W12_blk[r * C_IN:(r + 1) * C_IN, PK_AB + r * UD:PK_AB + (r + 1) * UD] = W2E2
        CbWsi_blk[r * UD:(r + 1) * UD, r * D_OUT:(r + 1) * D_OUT] = CbWsi

    kernel_params = (jnp.asarray(W12_blk, jnp.bfloat16),   # bf16 weight: native MXU rate
                     jnp.asarray(CbWsi_blk, jnp.float32))  # second matmul stays f32
    ref_params = (jnp.asarray(W1op), jnp.asarray(W2op), jnp.asarray(Wsi))
    return kernel_params, ref_params, jnp.asarray(Cfull)


# ------------------------- Pallas kernel (hot path) -------------------------
def tensor_product_kernel(x_ref, w12_ref, cw_ref, o_ref):
    # fused f1/f2 + outer-product expansion for 8 packed rows: single K=256 MXU matmul
    y = jnp.dot(x_ref[...], w12_ref[...], preferred_element_type=jnp.float32)  # [t, 1024] f32
    # vreg-aligned (multiple-of-128) slices; full 512-lane VPU multiply in f32
    ab = y[:, :PK_AB] * y[:, PK_AB:]                                            # [t, 512]
    # folded CG contraction + SelfInteraction; lane-dense [t, 128] store
    o_ref[...] = jnp.dot(ab, cw_ref[...], preferred_element_type=jnp.float32)


def _choose_tile(n_p):
    """Packed-row tile: >=2 grid steps when possible (v7x megacore), multiple of 16
    (bf16 sublane packing), capped at TBP; tiny inputs use a single exact block."""
    if n_p <= 16:
        return n_p
    t = -(-n_p // 2)                 # aim for at least 2 grid steps
    t = ((t + 15) // 16) * 16
    return min(TBP, t)


def tensor_product_forward(x, kernel_params):
    W12_blk, CbWsi_blk = kernel_params
    *size, cin = x.shape
    assert cin == C_IN
    xf = x.reshape(-1, cin)
    n = xf.shape[0]

    # pack 8 logical rows per physical row -> lane-dense [n_p, 256]
    n8 = ((n + PACK - 1) // PACK) * PACK
    if n8 != n:
        # TODO(synk): <8-row remainder still uses jnp.pad (copies x); only hit when n % 8 != 0.
        xf = jnp.pad(xf, ((0, n8 - n), (0, 0)))
    n_p = n8 // PACK
    # NOTE: in a real pipeline the producer would emit bf16 directly; this cast is a
    # one-off wrapper op, the kernel itself only ever reads bf16 activations.
    xp = xf.reshape(n_p, PK_IN).astype(jnp.bfloat16)

    t = _choose_tile(n_p)
    grid = (pl.cdiv(n_p, t),)        # ragged last block (if any) is masked by Pallas

    cost = pl.CostEstimate(
        flops=2 * n_p * (PK_IN * 2 * PK_AB + PK_AB * PK_OUT),
        transcendentals=0,
        bytes_accessed=(n_p * (PK_IN * 2 + PK_OUT * 4)
                        + W12_blk.size * W12_blk.dtype.itemsize
                        + CbWsi_blk.size * 4),
    )

    out_p = pl.pallas_call(
        tensor_product_kernel,
        out_shape=jax.ShapeDtypeStruct((n_p, PK_OUT), jnp.float32),
        grid_spec=pl.GridSpec(
            grid=grid,
            in_specs=[
                pl.BlockSpec((t, PK_IN), lambda i: (i, 0)),          # lane-dense bf16 rows
                pl.BlockSpec(W12_blk.shape, lambda i: (0, 0)),       # VMEM-resident weight
                pl.BlockSpec(CbWsi_blk.shape, lambda i: (0, 0)),     # VMEM-resident weight
            ],
            out_specs=pl.BlockSpec((t, PK_OUT), lambda i: (i, 0)),   # lane-dense f32 store
        ),
        compiler_params=pltpu.CompilerParams(
            dimension_semantics=("parallel",),            # shards row tiles across v7x's 2 TCs
            vmem_limit_bytes=48 * 1024 * 1024,            # v5e scoped default (16 MiB) too small
        ),
        cost_estimate=cost,
    )(xp, W12_blk, CbWsi_blk)

    out = out_p.reshape(n8, D_OUT)
    if n8 != n:
        out = out[:n]
    return out.reshape(*size, D_OUT)


# ------------------------- pure-JAX reference (unfolded path) -------------------------
def reference_forward(x, ref_params, Cfull, *, quantize_bf16=False):
    W1op, W2op, Wsi = ref_params
    *size, cin = x.shape
    xf = x.reshape(-1, cin)
    if quantize_bf16:
        # mirror the kernel's intentional bf16 quantization of x / first-matmul weights
        xf = xf.astype(jnp.bfloat16).astype(jnp.float32)
        W1op = W1op.astype(jnp.bfloat16).astype(jnp.float32)
        W2op = W2op.astype(jnp.bfloat16).astype(jnp.float32)
    x1 = (xf @ W1op).reshape(-1, MUL_MID, D1)            # f1 + view(*size, mul_mid, -1)
    x2 = (xf @ W2op).reshape(-1, MUL_MID, D2)            # f2 + view
    m = jnp.einsum('kij,bui,buj->buk', Cfull, x1, x2)    # Multiplication
    out = m.reshape(-1, MUL_MID * K_OUT) @ Wsi           # view(*size,-1) + SelfInteraction
    return out.reshape(*size, D_OUT)


# ------------------------- main -------------------------
if __name__ == "__main__":
    key = jax.random.PRNGKey(0)
    kp, kx = jax.random.split(key)
    kernel_params, ref_params, Cfull = init_params(kp)

    # small input: batch=2, points=128, channel=32 -> 256 logical rows = 32 packed rows,
    # tile = 16 packed rows -> grid of 2 (both TensorCores busy on v7x, no padding).
    x = jax.random.normal(kx, (2, 128, C_IN), jnp.float32)

    y = jax.block_until_ready(tensor_product_forward(x, kernel_params))
    assert y.shape == (2, 128, D_OUT)

    # tight check: kernel math vs f32 reference on bf16-quantized inputs
    # (only difference is fp accumulation order)
    y_q = jax.block_until_ready(reference_forward(x, ref_params, Cfull, quantize_bf16=True))
    np.testing.assert_allclose(np.asarray(y), np.asarray(y_q), rtol=1e-3, atol=1e-3)

    # loose check: bf16 input/weight quantization vs exact f32 module semantics
    y_ref = jax.block_until_ready(reference_forward(x, ref_params, Cfull))
    np.testing.assert_allclose(np.asarray(y), np.asarray(y_ref), rtol=5e-2, atol=5e-2)

    print("KERNEL_OK")
</pallas_src>

<mosaic_0001>
module attributes {stable_mosaic.version = 11 : i64} {
  func.func @tensor_product_kernel(%arg0: i32, %arg1: memref<16x256xbf16, #tpu.memory_space<vmem>>, %arg2: memref<256x1024xbf16, #tpu.memory_space<vmem>>, %arg3: memref<512x128xf32, #tpu.memory_space<vmem>>, %arg4: memref<16x128xf32, #tpu.memory_space<vmem>>) attributes {dimension_semantics = [#tpu.dimension_semantics<parallel>], iteration_bounds = array<i64: 2>, scalar_prefetch = 0 : i64, scratch_operands = 0 : i64, tpu.core_type = #tpu.core_type<tc>, window_params = [{transform_indices = @transform_0, window_bounds = array<i64: 16, 256>}, {pipeline_mode = #tpu.pipeline_mode<synchronous>, transform_indices = @transform_1, window_bounds = array<i64: 256, 1024>}, {pipeline_mode = #tpu.pipeline_mode<synchronous>, transform_indices = @transform_2, window_bounds = array<i64: 512, 128>}, {transform_indices = @transform_3, window_bounds = array<i64: 16, 128>}]} {
    %c0 = arith.constant 0 : index
    %c0_0 = arith.constant 0 : index
    %0 = vector.load %arg1[%c0, %c0_0] : memref<16x256xbf16, #tpu.memory_space<vmem>>, vector<16x256xbf16>
    %c0_1 = arith.constant 0 : index
    %c0_2 = arith.constant 0 : index
    %1 = vector.load %arg2[%c0_1, %c0_2] : memref<256x1024xbf16, #tpu.memory_space<vmem>>, vector<256x1024xbf16>
    %cst = arith.constant dense<0.000000e+00> : vector<16x1024xf32>
    %2 = tpu.matmul %0, %1, %cst {dimension_numbers = #tpu.dot_dimension_numbers<[1], [0], [0], [1], [0, 0, 1, 1], [], []>} : vector<16x256xbf16>, vector<256x1024xbf16>, vector<16x1024xf32> -> vector<16x1024xf32>
    %3 = vector.extract_strided_slice %2 {offsets = [0, 0], sizes = [16, 512], strides = [1, 1]} : vector<16x1024xf32> to vector<16x512xf32>
    %4 = vector.extract_strided_slice %2 {offsets = [0, 512], sizes = [16, 512], strides = [1, 1]} : vector<16x1024xf32> to vector<16x512xf32>
    %5 = arith.mulf %3, %4 : vector<16x512xf32>
    %c0_3 = arith.constant 0 : index
    %c0_4 = arith.constant 0 : index
    %6 = vector.load %arg3[%c0_3, %c0_4] : memref<512x128xf32, #tpu.memory_space<vmem>>, vector<512x128xf32>
    %cst_5 = arith.constant dense<0.000000e+00> : vector<16x128xf32>
    %7 = tpu.matmul %5, %6, %cst_5 {dimension_numbers = #tpu.dot_dimension_numbers<[1], [0], [0], [1], [0, 0, 1, 1], [], []>} : vector<16x512xf32>, vector<512x128xf32>, vector<16x128xf32> -> vector<16x128xf32>
    %c0_6 = arith.constant 0 : index
    %c0_7 = arith.constant 0 : index
    %8 = vector.load %arg4[%c0_6, %c0_7] : memref<16x128xf32, #tpu.memory_space<vmem>>, vector<16x128xf32>
    tpu.vector_store %arg4[%c0_6, %c0_7], %7 {strides = array<i32>} : memref<16x128xf32, #tpu.memory_space<vmem>>, vector<16x128xf32>,
    return
  }
  func.func @transform_0(%arg0: i32) -> (i32, i32) {
    %c0_i32 = arith.constant 0 : i32
    %c0_i32_0 = arith.constant 0 : i32
    return %arg0, %c0_i32 : i32, i32
  }
  func.func @transform_1(%arg0: i32) -> (i32, i32) {
    %c0_i32 = arith.constant 0 : i32
    %c0_i32_0 = arith.constant 0 : i32
    %c0_i32_1 = arith.constant 0 : i32
    return %c0_i32, %c0_i32_0 : i32, i32
  }
  func.func @transform_2(%arg0: i32) -> (i32, i32) {
    %c0_i32 = arith.constant 0 : i32
    %c0_i32_0 = arith.constant 0 : i32
    %c0_i32_1 = arith.constant 0 : i32
    return %c0_i32, %c0_i32_0 : i32, i32
  }
  func.func @transform_3(%arg0: i32) -> (i32, i32) {
    %c0_i32 = arith.constant 0 : i32
    %c0_i32_0 = arith.constant 0 : i32
    return %arg0, %c0_i32 : i32, i32
  }
}

</mosaic_0001>

<llo_original>
// kernel: tpu_custom_call.1
$region0: #{tpu_custom_call.1}
  #allocation0 [shape = 'u32[]', space=smem, size = 0x4, offset = 0x4, fixed_abs, tag = 'smem constant byte address 0x4 - core index']
  #allocation1 [shape = 'u32[144,128]{1,0:T(1,128)}', space=vmem, size = 0x12000, scoped, tag = 'internal scratch']
  %s0 = inlined_call_operand.hbm [shape: bf16[32,256], index: 0, kind: input, shape index: {}]
  %s1 = inlined_call_operand.hbm [shape: bf16[256,1024], index: 1, kind: input, shape index: {}]
  %s2 = inlined_call_operand.hbm [shape: f32[512,128], index: 2, kind: input, shape index: {}]
  %s3 = inlined_call_operand.hbm [shape: f32[32,128], index: 3, kind: output, shape index: {}]
  %s4 = sld [smem:[#allocation0]]
  $region57: #{tpu_custom_call.1} parent=0
    _
  %s6 = ssub.s32 1, %s4
  %s7 = scalar_select 0, %s6, %s4
  $region1: #{tpu_custom_call.1} parent=0
    #allocation2 [shape = 'u8[16384]{0}', space=vmem, size = 0x4000, scoped, tag = 'input window, operand 0']
    #allocation3 [shape = 's32[2]{0}', space=sflag, size = 0x8, scoped, tag = 'scoped memory for tpu_custom_call.1']
    #allocation4 [shape = 's32[2]{0}', space=sflag, size = 0x8, scoped, tag = 'scoped memory for tpu_custom_call.1']
    #allocation5 [shape = 'u8[524288]{0}', space=vmem, size = 0x80000, scoped, tag = 'input window, operand 1, single buffered']
    #allocation6 [shape = 's32[1]{0}', space=sflag, size = 0x4, scoped, tag = 'scoped memory for tpu_custom_call.1']
    #allocation7 [shape = 'u8[262144]{0}', space=vmem, size = 0x40000, scoped, tag = 'input window, operand 2, single buffered']
    #allocation8 [shape = 'u8[16384]{0}', space=vmem, size = 0x4000, scoped, tag = 'output window, operand 0']
    %8 = vsyncpa [#allocation3], 0
    %s9 = scalar_lea.sflag [#allocation3], 1
    %10 = vsyncpa %s9, 0
    %11 = vsyncpa [#allocation6], 0
    %12 = vsyncpa [#allocation4], 0
    %s13 = scalar_lea.sflag [#allocation4], 1
    %14 = vsyncpa %s13, 0
    loop: start=0, step=1, limit=4
    $region2: #{tpu_custom_call.1} parent=1 // loop_pre_header
      _
    $region3: #{tpu_custom_call.1} parent=1 // loop_header
      %s16 = sphi 0, %s20
      %p17 = scmp.ge.s32.totalorder %s16, 4
      %s26 = sphi 0, %s28
      %s29 = sphi 0, %s26
      %s30 = sphi 0, %s29
      %s46 = sphi 0, %s30
      %s50 = sphi 0, %s50
      %s52 = sphi 0, %s50
      %s53 = sphi 0, %s52
      %s67 = sphi 0, %s53
      %s71 = sphi 0, %s71
      %s73 = sphi 0, %s71
      %s74 = sphi 0, %s73
      %s88 = sphi 0, %s74
      %s94 = sphi 0, %s96
      %s97 = sphi 0, %s94
      %s98 = sphi 0, %s97
      %s114 = sphi 0, %s98
    $region4: #{tpu_custom_call.1} parent=1 // loop_header_branch
      %19 = sbr.rel (%p17) target = $region8
    $region5: #{tpu_custom_call.1} parent=1 // loop_body
      %s21 = ssub.s32 %s16, 1
      %s22 = ssub.s32 %s16, 2
      %s23 = sadd.s32 %s16, 1
      %s24 = ssub.s32 %s16, %s23
      %p25 = scmp.eq.s32.totalorder %s24, 0
      %s27 = sadd.s32 %s26, 1
      %s28 = scalar_select %p25, %s26, %s27
      %p31 = pneg %p25
      %p32 = scmp.eq.s32.totalorder %s16, 1
      %p33 = por %p31, %p32
      %p34 = scmp.ne.s32.totalorder %s26, %s29
      %p35 = scmp.eq.s32.totalorder %s16, 0
      %p36 = por %p34, %p35
      %p37 = scmp.ne.s32.totalorder %s26, %s29
      %p38 = scmp.eq.s32.totalorder %s21, 1
      %p39 = por %p37, %p38
      %p40 = scmp.ne.s32.totalorder %s29, %s30
      %p41 = scmp.eq.s32.totalorder %s21, 0
      %p42 = por %p40, %p41
      %p43 = scmp.ne.s32.totalorder %s29, %s30
      %p44 = scmp.eq.s32.totalorder %s22, 1
      %p45 = por %p43, %p44
      %p47 = scmp.ne.s32.totalorder %s30, %s46
      %p48 = scmp.eq.s32.totalorder %s22, 0
      %p49 = por %p47, %p48
      %s51 = sadd.s32 %s50, 1
      %p54 = scmp.eq.s32.totalorder %s16, 1
      %p55 = scmp.ne.s32.totalorder %s50, %s52
      %p56 = scmp.eq.s32.totalorder %s16, 0
      %p57 = por %p55, %p56
      %p58 = scmp.ne.s32.totalorder %s50, %s52
      %p59 = scmp.eq.s32.totalorder %s21, 1
      %p60 = por %p58, %p59
      %p61 = scmp.ne.s32.totalorder %s52, %s53
      %p62 = scmp.eq.s32.totalorder %s21, 0
      %p63 = por %p61, %p62
      %p64 = scmp.ne.s32.totalorder %s52, %s53
      %p65 = scmp.eq.s32.totalorder %s22, 1
      %p66 = por %p64, %p65
      %p68 = scmp.ne.s32.totalorder %s53, %s67
      %p69 = scmp.eq.s32.totalorder %s22, 0
      %p70 = por %p68, %p69
      %s72 = sadd.s32 %s71, 1
      %p75 = scmp.eq.s32.totalorder %s16, 1
      %p76 = scmp.ne.s32.totalorder %s71, %s73
      %p77 = scmp.eq.s32.totalorder %s16, 0
      %p78 = por %p76, %p77
      %p79 = scmp.ne.s32.totalorder %s71, %s73
      %p80 = scmp.eq.s32.totalorder %s21, 1
      %p81 = por %p79, %p80
      %p82 = scmp.ne.s32.totalorder %s73, %s74
      %p83 = scmp.eq.s32.totalorder %s21, 0
      %p84 = por %p82, %p83
      %p85 = scmp.ne.s32.totalorder %s73, %s74
      %p86 = scmp.eq.s32.totalorder %s22, 1
      %p87 = por %p85, %p86
      %p89 = scmp.ne.s32.totalorder %s74, %s88
      %p90 = scmp.eq.s32.totalorder %s22, 0
      %p91 = por %p89, %p90
      %s92 = ssub.s32 %s16, %s23
      %p93 = scmp.eq.s32.totalorder %s92, 0
      %s95 = sadd.s32 %s94, 1
      %s96 = scalar_select %p93, %s94, %s95
      %p99 = pneg %p93
      %p100 = scmp.eq.s32.totalorder %s16, 1
      %p101 = por %p99, %p100
      %p102 = scmp.ne.s32.totalorder %s94, %s97
      %p103 = scmp.eq.s32.totalorder %s16, 0
      %p104 = por %p102, %p103
      %p105 = scmp.ne.s32.totalorder %s94, %s97
      %p106 = scmp.eq.s32.totalorder %s21, 1
      %p107 = por %p105, %p106
      %p108 = scmp.ne.s32.totalorder %s97, %s98
      %p109 = scmp.eq.s32.totalorder %s21, 0
      %p110 = por %p108, %p109
      %p111 = scmp.ne.s32.totalorder %s97, %s98
      %p112 = scmp.eq.s32.totalorder %s22, 1
      %p113 = por %p111, %p112
      %p115 = scmp.ne.s32.totalorder %s98, %s114
      %p116 = scmp.eq.s32.totalorder %s22, 0
      %p117 = por %p115, %p116
      %p118 = scmp.le.s32.totalorder 1, %s16
      %p119 = scmp.lt.s32.totalorder %s16, 3
      %p120 = pnand %p118, %p119
      %p121 = pneg %p120
      // Predicated region
      $region9: #{tpu_custom_call.1} parent=5 // pred_check
        _
      $region10: #{tpu_custom_call.1} parent=5 // pred_check_branch
        %123 = sbr.rel (%p120) target = $region12
      $region11: #{tpu_custom_call.1} parent=5 // pred_region
        %s124 = ssub.s32 %s16, 1
        // Predicated region
        $region13: #{tpu_custom_call.1} parent=11 // pred_check
          %p125 = pneg %p63
        $region14: #{tpu_custom_call.1} parent=11 // pred_check_branch
          %127 = sbr.rel (%p125) target = $region16
        $region15: #{tpu_custom_call.1} parent=11 // pred_region
          %s129 = ssub.s32 16384, 16384
          %130 = vsyncadd [#allocation6], %s129
          %s131 = sshll.u32 [#allocation5], 4
          %s132 = int_to_ptr.vmem [resolvable:$true] %s131
          %137 = dma.hbm_to_vmem [thread:$0]  %s1, 16384, %s132, [#allocation6], 512, 512, 32
        $region16: #{tpu_custom_call.1} parent=11 // pred_fallthru
          _
        // Predicated region
        $region17: #{tpu_custom_call.1} parent=11 // pred_check
          %p138 = pneg %p84
        $region18: #{tpu_custom_call.1} parent=11 // pred_check_branch
          %140 = sbr.rel (%p138) target = $region20
        $region19: #{tpu_custom_call.1} parent=11 // pred_region
          %s142 = ssub.s32 8192, 8192
          %143 = vsyncadd [#allocation6], %s142
          %s144 = sshll.u32 [#allocation7], 4
          %s145 = int_to_ptr.vmem [resolvable:$true] %s144
          %150 = dma.hbm_to_vmem [thread:$0]  %s2, 8192, %s145, [#allocation6], 128, 128, 8
        $region20: #{tpu_custom_call.1} parent=11 // pred_fallthru
          _
      $region12: #{tpu_custom_call.1} parent=5 // pred_fallthru
        _
      %p151 = scmp.lt.s32.totalorder %s16, 2
      // Predicated region
      $region21: #{tpu_custom_call.1} parent=5 // pred_check
        %p152 = pneg %p151
      $region22: #{tpu_custom_call.1} parent=5 // pred_check_branch
        %154 = sbr.rel (%p152) target = $region24
      $region23: #{tpu_custom_call.1} parent=5 // pred_region
        // Predicated region
        $region25: #{tpu_custom_call.1} parent=23 // pred_check
          %p155 = pneg %p36
        $region26: #{tpu_custom_call.1} parent=23 // pred_check_branch
          %157 = sbr.rel (%p155) target = $region28
        $region27: #{tpu_custom_call.1} parent=23 // pred_region
          %s158 = sand.u32 %s26, 1
          %s159 = scalar_lea.sflag [#allocation3], %s158
          %s160 = sand.u32 %s26, 1
          %s161 = smul.addr %s160, 16
          %s162 = scalar_lea.vmem [#allocation2], %s161
          %s163 = smul.u32 2, %s16
          %s165 = ssub.s32 256, 256
          %166 = vsyncadd %s159, %s165
          %s167 = smul.addr %s163, 2
          %s168 = smul.addr %s167, 64
          %s169 = scalar_lea.hbm %s0, %s168
          %s170 = sshll.u32 %s162, 4
          %s171 = int_to_ptr.vmem [resolvable:$true] %s170
          %176 = dma.hbm_to_vmem [thread:$0]  %s169, 256, %s171, %s159, 128, 128, 8
        $region28: #{tpu_custom_call.1} parent=23 // pred_fallthru
          _
      $region24: #{tpu_custom_call.1} parent=5 // pred_fallthru
        _
      %p177 = scmp.le.s32.totalorder 1, %s16
      %p178 = scmp.lt.s32.totalorder %s16, 3
      %p179 = pnand %p177, %p178
      %p180 = pneg %p179
      // Predicated region
      $region29: #{tpu_custom_call.1} parent=5 // pred_check
        _
      $region30: #{tpu_custom_call.1} parent=5 // pred_check_branch
        %182 = sbr.rel (%p179) target = $region32
      $region31: #{tpu_custom_call.1} parent=5 // pred_region
        %s183 = ssub.s32 %s16, 1
        %s184 = sand.u32 %s29, 1
        %s185 = scalar_lea.sflag [#allocation3], %s184
        %s186 = sand.u32 %s29, 1
        %s187 = smul.addr %s186, 16
        %s188 = scalar_lea.vmem [#allocation2], %s187
        // Predicated region
        $region33: #{tpu_custom_call.1} parent=31 // pred_check
          %p189 = pneg %p42
        $region34: #{tpu_custom_call.1} parent=31 // pred_check_branch
          %191 = sbr.rel (%p189) target = $region36
        $region35: #{tpu_custom_call.1} parent=31 // pred_region
          %192 = dma.done %s185, 256
        $region36: #{tpu_custom_call.1} parent=31 // pred_fallthru
          _
        // Predicated region
        $region37: #{tpu_custom_call.1} parent=31 // pred_check
          %p193 = pneg %p63
        $region38: #{tpu_custom_call.1} parent=31 // pred_check_branch
          %195 = sbr.rel (%p193) target = $region40
        $region39: #{tpu_custom_call.1} parent=31 // pred_region
          %196 = dma.done [#allocation6], 16384
        $region40: #{tpu_custom_call.1} parent=31 // pred_fallthru
          _
        // Predicated region
        $region41: #{tpu_custom_call.1} parent=31 // pred_check
          %p197 = pneg %p84
        $region42: #{tpu_custom_call.1} parent=31 // pred_check_branch
          %199 = sbr.rel (%p197) target = $region44
        $region43: #{tpu_custom_call.1} parent=31 // pred_region
          %200 = dma.done [#allocation6], 8192
        $region44: #{tpu_custom_call.1} parent=31 // pred_fallthru
          _
        %s201 = sand.u32 %s29, 1
        %s202 = scalar_lea.sflag [#allocation3], %s201
        %s203 = sand.u32 %s29, 1
        %s204 = smul.addr %s203, 16
        %s205 = scalar_lea.vmem [#allocation2], %s204
        %p206 = pneg %p42
        %p207 = pneg %p39
        %p208 = pneg %p63
        %p209 = pneg %p60
        %p210 = pneg %p84
        %p211 = pneg %p81
        %p212 = pneg %p110
        %p213 = pneg %p107
        %s214 = sand.u32 %s97, 1
        %s215 = scalar_lea.sflag [#allocation4], %s214
        %s216 = sand.u32 %s97, 1
        %s217 = smul.addr %s216, 16
        %s218 = scalar_lea.vmem [#allocation8], %s217
        %s219 = smul.u32 2, %s21
        %s220 = smul.u32 2, %s21
        %v221 = vld [vmem:[%s188] sm:$0xff]
        %v222 = vld [vmem:[%s188 + $0x8] sm:$0xff]
        %v223 = vld [vmem:[#allocation5] sm:$0xff]
        %v224 = vld [vmem:[#allocation5 + $0x8] sm:$0xff]
        %v225 = vld [vmem:[#allocation5 + $0x10] sm:$0xff]
        %v226 = vld [vmem:[#allocation5 + $0x18] sm:$0xff]
        %v227 = vld [vmem:[#allocation5 + $0x20] sm:$0xff]
        %v228 = vld [vmem:[#allocation5 + $0x28] sm:$0xff]
        %v229 = vld [vmem:[#allocation5 + $0x30] sm:$0xff]
        %v230 = vld [vmem:[#allocation5 + $0x38] sm:$0xff]
        %v231 = vld [vmem:[#allocation5 + $0x40] sm:$0xff]
        %v232 = vld [vmem:[#allocation5 + $0x48] sm:$0xff]
        %v233 = vld [vmem:[#allocation5 + $0x50] sm:$0xff]
        %v234 = vld [vmem:[#allocation5 + $0x58] sm:$0xff]
        %v235 = vld [vmem:[#allocation5 + $0x60] sm:$0xff]
        %v236 = vld [vmem:[#allocation5 + $0x68] sm:$0xff]
        %v237 = vld [vmem:[#allocation5 + $0x70] sm:$0xff]
        %v238 = vld [vmem:[#allocation5 + $0x78] sm:$0xff]
        %v239 = vld [vmem:[#allocation5 + $0x80] sm:$0xff]
        %v240 = vld [vmem:[#allocation5 + $0x88] sm:$0xff]
        %v241 = vld [vmem:[#allocation5 + $0x90] sm:$0xff]
        %v242 = vld [vmem:[#allocation5 + $0x98] sm:$0xff]
        %v243 = vld [vmem:[#allocation5 + $0xa0] sm:$0xff]
        %v244 = vld [vmem:[#allocation5 + $0xa8] sm:$0xff]
        %v245 = vld [vmem:[#allocation5 + $0xb0] sm:$0xff]
        %v246 = vld [vmem:[#allocation5 + $0xb8] sm:$0xff]
        %v247 = vld [vmem:[#allocation5 + $0xc0] sm:$0xff]
        %v248 = vld [vmem:[#allocation5 + $0xc8] sm:$0xff]
        %v249 = vld [vmem:[#allocation5 + $0xd0] sm:$0xff]
        %v250 = vld [vmem:[#allocation5 + $0xd8] sm:$0xff]
        %v251 = vld [vmem:[#allocation5 + $0xe0] sm:$0xff]
        %v252 = vld [vmem:[#allocation5 + $0xe8] sm:$0xff]
        %v253 = vld [vmem:[#allocation5 + $0xf0] sm:$0xff]
        %v254 = vld [vmem:[#allocation5 + $0xf8] sm:$0xff]
        %v255 = vld [vmem:[#allocation5 + $0x100] sm:$0xff]
        %v256 = vld [vmem:[#allocation5 + $0x108] sm:$0xff]
        %v257 = vld [vmem:[#allocation5 + $0x110] sm:$0xff]
        %v258 = vld [vmem:[#allocation5 + $0x118] sm:$0xff]
        %v259 = vld [vmem:[#allocation5 + $0x120] sm:$0xff]
        %v260 = vld [vmem:[#allocation5 + $0x128] sm:$0xff]
        %v261 = vld [vmem:[#allocation5 + $0x130] sm:$0xff]
        %v262 = vld [vmem:[#allocation5 + $0x138] sm:$0xff]
        %v263 = vld [vmem:[#allocation5 + $0x140] sm:$0xff]
        %v264 = vld [vmem:[#allocation5 + $0x148] sm:$0xff]
        %v265 = vld [vmem:[#allocation5 + $0x150] sm:$0xff]
        %v266 = vld [vmem:[#allocation5 + $0x158] sm:$0xff]
        %v267 = vld [vmem:[#allocation5 + $0x160] sm:$0xff]
        %v268 = vld [vmem:[#allocation5 + $0x168] sm:$0xff]
        %v269 = vld [vmem:[#allocation5 + $0x170] sm:$0xff]
        %v270 = vld [vmem:[#allocation5 + $0x178] sm:$0xff]
        %v271 = vld [vmem:[#allocation5 + $0x180] sm:$0xff]
        %v272 = vld [vmem:[#allocation5 + $0x188] sm:$0xff]
        %v273 = vld [vmem:[#allocation5 + $0x190] sm:$0xff]
        %v274 = vld [vmem:[#allocation5 + $0x198] sm:$0xff]
        %v275 = vld [vmem:[#allocation5 + $0x1a0] sm:$0xff]
        %v276 = vld [vmem:[#allocation5 + $0x1a8] sm:$0xff]
        %v277 = vld [vmem:[#allocation5 + $0x1b0] sm:$0xff]
        %v278 = vld [vmem:[#allocation5 + $0x1b8] sm:$0xff]
        %v279 = vld [vmem:[#allocation5 + $0x1c0] sm:$0xff]
        %v280 = vld [vmem:[#allocation5 + $0x1c8] sm:$0xff]
        %v281 = vld [vmem:[#allocation5 + $0x1d0] sm:$0xff]
        %v282 = vld [vmem:[#allocation5 + $0x1d8] sm:$0xff]
        %v283 = vld [vmem:[#allocation5 + $0x1e0] sm:$0xff]
        %v284 = vld [vmem:[#allocation5 + $0x1e8] sm:$0xff]
        %v285 = vld [vmem:[#allocation5 + $0x1f0] sm:$0xff]
        %v286 = vld [vmem:[#allocation5 + $0x1f8] sm:$0xff]
        %v287 = vld [vmem:[#allocation5 + $0x200] sm:$0xff]
        %v288 = vld [vmem:[#allocation5 + $0x208] sm:$0xff]
        %v289 = vld [vmem:[#allocation5 + $0x210] sm:$0xff]
        %v290 = vld [vmem:[#allocation5 + $0x218] sm:$0xff]
        %v291 = vld [vmem:[#allocation5 + $0x220] sm:$0xff]
        %v292 = vld [vmem:[#allocation5 + $0x228] sm:$0xff]
        %v293 = vld [vmem:[#allocation5 + $0x230] sm:$0xff]
        %v294 = vld [vmem:[#allocation5 + $0x238] sm:$0xff]
        %v295 = vld [vmem:[#allocation5 + $0x240] sm:$0xff]
        %v296 = vld [vmem:[#allocation5 + $0x248] sm:$0xff]
        %v297 = vld [vmem:[#allocation5 + $0x250] sm:$0xff]
        %v298 = vld [vmem:[#allocation5 + $0x258] sm:$0xff]
        %v299 = vld [vmem:[#allocation5 + $0x260] sm:$0xff]
        %v300 = vld [vmem:[#allocation5 + $0x268] sm:$0xff]
        %v301 = vld [vmem:[#allocation5 + $0x270] sm:$0xff]
        %v302 = vld [vmem:[#allocation5 + $0x278] sm:$0xff]
        %v303 = vld [vmem:[#allocation5 + $0x280] sm:$0xff]
        %v304 = vld [vmem:[#allocation5 + $0x288] sm:$0xff]
        %v305 = vld [vmem:[#allocation5 + $0x290] sm:$0xff]
        %v306 = vld [vmem:[#allocation5 + $0x298] sm:$0xff]
        %v307 = vld [vmem:[#allocation5 + $0x2a0] sm:$0xff]
        %v308 = vld [vmem:[#allocation5 + $0x2a8] sm:$0xff]
        %v309 = vld [vmem:[#allocation5 + $0x2b0] sm:$0xff]
        %v310 = vld [vmem:[#allocation5 + $0x2b8] sm:$0xff]
        %v311 = vld [vmem:[#allocation5 + $0x2c0] sm:$0xff]
        %v312 = vld [vmem:[#allocation5 + $0x2c8] sm:$0xff]
        %v313 = vld [vmem:[#allocation5 + $0x2d0] sm:$0xff]
        %v314 = vld [vmem:[#allocation5 + $0x2d8] sm:$0xff]
        %v315 = vld [vmem:[#allocation5 + $0x2e0] sm:$0xff]
        %v316 = vld [vmem:[#allocation5 + $0x2e8] sm:$0xff]
        %v317 = vld [vmem:[#allocation5 + $0x2f0] sm:$0xff]
        %v318 = vld [vmem:[#allocation5 + $0x2f8] sm:$0xff]
        %v319 = vld [vmem:[#allocation5 + $0x300] sm:$0xff]
        %v320 = vld [vmem:[#allocation5 + $0x308] sm:$0xff]
        %v321 = vld [vmem:[#allocation5 + $0x310] sm:$0xff]
        %v322 = vld [vmem:[#allocation5 + $0x318] sm:$0xff]
        %v323 = vld [vmem:[#allocation5 + $0x320] sm:$0xff]
        %v324 = vld [vmem:[#allocation5 + $0x328] sm:$0xff]
        %v325 = vld [vmem:[#allocation5 + $0x330] sm:$0xff]
        %v326 = vld [vmem:[#allocation5 + $0x338] sm:$0xff]
        %v327 = vld [vmem:[#allocation5 + $0x340] sm:$0xff]
        %v328 = vld [vmem:[#allocation5 + $0x348] sm:$0xff]
        %v329 = vld [vmem:[#allocation5 + $0x350] sm:$0xff]
        %v330 = vld [vmem:[#allocation5 + $0x358] sm:$0xff]
        %v331 = vld [vmem:[#allocation5 + $0x360] sm:$0xff]
        %v332 = vld [vmem:[#allocation5 + $0x368] sm:$0xff]
        %v333 = vld [vmem:[#allocation5 + $0x370] sm:$0xff]
        %v334 = vld [vmem:[#allocation5 + $0x378] sm:$0xff]
        %v335 = vld [vmem:[#allocation5 + $0x380] sm:$0xff]
        %v336 = vld [vmem:[#allocation5 + $0x388] sm:$0xff]
        %v337 = vld [vmem:[#allocation5 + $0x390] sm:$0xff]
        %v338 = vld [vmem:[#allocation5 + $0x398] sm:$0xff]
        %v339 = vld [vmem:[#allocation5 + $0x3a0] sm:$0xff]
        %v340 = vld [vmem:[#allocation5 + $0x3a8] sm:$0xff]
        %v341 = vld [vmem:[#allocation5 + $0x3b0] sm:$0xff]
        %v342 = vld [vmem:[#allocation5 + $0x3b8] sm:$0xff]
        %v343 = vld [vmem:[#allocation5 + $0x3c0] sm:$0xff]
        %v344 = vld [vmem:[#allocation5 + $0x3c8] sm:$0xff]
        %v345 = vld [vmem:[#allocation5 + $0x3d0] sm:$0xff]
        %v346 = vld [vmem:[#allocation5 + $0x3d8] sm:$0xff]
        %v347 = vld [vmem:[#allocation5 + $0x3e0] sm:$0xff]
        %v348 = vld [vmem:[#allocation5 + $0x3e8] sm:$0xff]
        %v349 = vld [vmem:[#allocation5 + $0x3f0] sm:$0xff]
        %v350 = vld [vmem:[#allocation5 + $0x3f8] sm:$0xff]
        %v353 = vunpack.c.l.b16 %v221
        %v354 = vunpack.c.h.b16 %v221
        %v355 = vunpack.c.l.b16 %v222
        %v356 = vunpack.c.h.b16 %v222
        %v357 = vpack.c.b16 %v355, %v353
        %v358 = vpack.c.b16 %v356, %v354
        %v489 = vunpack.c.l.b16 %v223
        %v490 = vunpack.c.h.b16 %v223
        %v491 = vunpack.c.l.b16 %v224
        %v492 = vunpack.c.h.b16 %v224
        %v493 = vunpack.c.l.b16 %v225
        %v494 = vunpack.c.h.b16 %v225
        %v495 = vunpack.c.l.b16 %v226
        %v496 = vunpack.c.h.b16 %v226
        %v497 = vunpack.c.l.b16 %v227
        %v498 = vunpack.c.h.b16 %v227
        %v499 = vunpack.c.l.b16 %v228
        %v500 = vunpack.c.h.b16 %v228
        %v501 = vunpack.c.l.b16 %v229
        %v502 = vunpack.c.h.b16 %v229
        %v503 = vunpack.c.l.b16 %v230
        %v504 = vunpack.c.h.b16 %v230
        %v505 = vunpack.c.l.b16 %v231
        %v506 = vunpack.c.h.b16 %v231
        %v507 = vunpack.c.l.b16 %v232
        %v508 = vunpack.c.h.b16 %v232
        %v509 = vunpack.c.l.b16 %v233
        %v510 = vunpack.c.h.b16 %v233
        %v511 = vunpack.c.l.b16 %v234
        %v512 = vunpack.c.h.b16 %v234
        %v513 = vunpack.c.l.b16 %v235
        %v514 = vunpack.c.h.b16 %v235
        %v515 = vunpack.c.l.b16 %v236
        %v516 = vunpack.c.h.b16 %v236
        %v517 = vunpack.c.l.b16 %v237
        %v518 = vunpack.c.h.b16 %v237
        %v519 = vunpack.c.l.b16 %v238
        %v520 = vunpack.c.h.b16 %v238
        %v521 = vunpack.c.l.b16 %v239
        %v522 = vunpack.c.h.b16 %v239
        %v523 = vunpack.c.l.b16 %v240
        %v524 = vunpack.c.h.b16 %v240
        %v525 = vunpack.c.l.b16 %v241
        %v526 = vunpack.c.h.b16 %v241
        %v527 = vunpack.c.l.b16 %v242
        %v528 = vunpack.c.h.b16 %v242
        %v529 = vunpack.c.l.b16 %v243
        %v530 = vunpack.c.h.b16 %v243
        %v531 = vunpack.c.l.b16 %v244
        %v532 = vunpack.c.h.b16 %v244
        %v533 = vunpack.c.l.b16 %v245
        %v534 = vunpack.c.h.b16 %v245
        %v535 = vunpack.c.l.b16 %v246
        %v536 = vunpack.c.h.b16 %v246
        %v537 = vunpack.c.l.b16 %v247
        %v538 = vunpack.c.h.b16 %v247
        %v539 = vunpack.c.l.b16 %v248
        %v540 = vunpack.c.h.b16 %v248
        %v541 = vunpack.c.l.b16 %v249
        %v542 = vunpack.c.h.b16 %v249
        %v543 = vunpack.c.l.b16 %v250
        %v544 = vunpack.c.h.b16 %v250
        %v545 = vunpack.c.l.b16 %v251
        %v546 = vunpack.c.h.b16 %v251
        %v547 = vunpack.c.l.b16 %v252
        %v548 = vunpack.c.h.b16 %v252
        %v549 = vunpack.c.l.b16 %v253
        %v550 = vunpack.c.h.b16 %v253
        %v551 = vunpack.c.l.b16 %v254
        %v552 = vunpack.c.h.b16 %v254
        %v553 = vunpack.c.l.b16 %v255
        %v554 = vunpack.c.h.b16 %v255
        %v555 = vunpack.c.l.b16 %v256
        %v556 = vunpack.c.h.b16 %v256
        %v557 = vunpack.c.l.b16 %v257
        %v558 = vunpack.c.h.b16 %v257
        %v559 = vunpack.c.l.b16 %v258
        %v560 = vunpack.c.h.b16 %v258
        %v561 = vunpack.c.l.b16 %v259
        %v562 = vunpack.c.h.b16 %v259
        %v563 = vunpack.c.l.b16 %v260
        %v564 = vunpack.c.h.b16 %v260
        %v565 = vunpack.c.l.b16 %v261
        %v566 = vunpack.c.h.b16 %v261
        %v567 = vunpack.c.l.b16 %v262
        %v568 = vunpack.c.h.b16 %v262
        %v569 = vunpack.c.l.b16 %v263
        %v570 = vunpack.c.h.b16 %v263
        %v571 = vunpack.c.l.b16 %v264
        %v572 = vunpack.c.h.b16 %v264
        %v573 = vunpack.c.l.b16 %v265
        %v574 = vunpack.c.h.b16 %v265
        %v575 = vunpack.c.l.b16 %v266
        %v576 = vunpack.c.h.b16 %v266
        %v577 = vunpack.c.l.b16 %v267
        %v578 = vunpack.c.h.b16 %v267
        %v579 = vunpack.c.l.b16 %v268
        %v580 = vunpack.c.h.b16 %v268
        %v581 = vunpack.c.l.b16 %v269
        %v582 = vunpack.c.h.b16 %v269
        %v583 = vunpack.c.l.b16 %v270
        %v584 = vunpack.c.h.b16 %v270
        %v585 = vunpack.c.l.b16 %v271
        %v586 = vunpack.c.h.b16 %v271
        %v587 = vunpack.c.l.b16 %v272
        %v588 = vunpack.c.h.b16 %v272
        %v589 = vunpack.c.l.b16 %v273
        %v590 = vunpack.c.h.b16 %v273
        %v591 = vunpack.c.l.b16 %v274
        %v592 = vunpack.c.h.b16 %v274
        %v593 = vunpack.c.l.b16 %v275
        %v594 = vunpack.c.h.b16 %v275
        %v595 = vunpack.c.l.b16 %v276
        %v596 = vunpack.c.h.b16 %v276
        %v597 = vunpack.c.l.b16 %v277
        %v598 = vunpack.c.h.b16 %v277
        %v599 = vunpack.c.l.b16 %v278
        %v600 = vunpack.c.h.b16 %v278
        %v601 = vunpack.c.l.b16 %v279
        %v602 = vunpack.c.h.b16 %v279
        %v603 = vunpack.c.l.b16 %v280
        %v604 = vunpack.c.h.b16 %v280
        %v605 = vunpack.c.l.b16 %v281
        %v606 = vunpack.c.h.b16 %v281
        %v607 = vunpack.c.l.b16 %v282
        %v608 = vunpack.c.h.b16 %v282
        %v609 = vunpack.c.l.b16 %v283
        %v610 = vunpack.c.h.b16 %v283
        %v611 = vunpack.c.l.b16 %v284
        %v612 = vunpack.c.h.b16 %v284
        %v613 = vunpack.c.l.b16 %v285
        %v614 = vunpack.c.h.b16 %v285
        %v615 = vunpack.c.l.b16 %v286
        %v616 = vunpack.c.h.b16 %v286
        %v617 = vunpack.c.l.b16 %v287
        %v618 = vunpack.c.h.b16 %v287
        %v619 = vunpack.c.l.b16 %v288
        %v620 = vunpack.c.h.b16 %v288
        %v621 = vunpack.c.l.b16 %v289
        %v622 = vunpack.c.h.b16 %v289
        %v623 = vunpack.c.l.b16 %v290
        %v624 = vunpack.c.h.b16 %v290
        %v625 = vunpack.c.l.b16 %v291
        %v626 = vunpack.c.h.b16 %v291
        %v627 = vunpack.c.l.b16 %v292
        %v628 = vunpack.c.h.b16 %v292
        %v629 = vunpack.c.l.b16 %v293
        %v630 = vunpack.c.h.b16 %v293
        %v631 = vunpack.c.l.b16 %v294
        %v632 = vunpack.c.h.b16 %v294
        %v633 = vunpack.c.l.b16 %v295
        %v634 = vunpack.c.h.b16 %v295
        %v635 = vunpack.c.l.b16 %v296
        %v636 = vunpack.c.h.b16 %v296
        %v637 = vunpack.c.l.b16 %v297
        %v638 = vunpack.c.h.b16 %v297
        %v639 = vunpack.c.l.b16 %v298
        %v640 = vunpack.c.h.b16 %v298
        %v641 = vunpack.c.l.b16 %v299
        %v642 = vunpack.c.h.b16 %v299
        %v643 = vunpack.c.l.b16 %v300
        %v644 = vunpack.c.h.b16 %v300
        %v645 = vunpack.c.l.b16 %v301
        %v646 = vunpack.c.h.b16 %v301
        %v647 = vunpack.c.l.b16 %v302
        %v648 = vunpack.c.h.b16 %v302
        %v649 = vunpack.c.l.b16 %v303
        %v650 = vunpack.c.h.b16 %v303
        %v651 = vunpack.c.l.b16 %v304
        %v652 = vunpack.c.h.b16 %v304
        %v653 = vunpack.c.l.b16 %v305
        %v654 = vunpack.c.h.b16 %v305
        %v655 = vunpack.c.l.b16 %v306
        %v656 = vunpack.c.h.b16 %v306
        %v657 = vunpack.c.l.b16 %v307
        %v658 = vunpack.c.h.b16 %v307
        %v659 = vunpack.c.l.b16 %v308
        %v660 = vunpack.c.h.b16 %v308
        %v661 = vunpack.c.l.b16 %v309
        %v662 = vunpack.c.h.b16 %v309
        %v663 = vunpack.c.l.b16 %v310
        %v664 = vunpack.c.h.b16 %v310
        %v665 = vunpack.c.l.b16 %v311
        %v666 = vunpack.c.h.b16 %v311
        %v667 = vunpack.c.l.b16 %v312
        %v668 = vunpack.c.h.b16 %v312
        %v669 = vunpack.c.l.b16 %v313
        %v670 = vunpack.c.h.b16 %v313
        %v671 = vunpack.c.l.b16 %v314
        %v672 = vunpack.c.h.b16 %v314
        %v673 = vunpack.c.l.b16 %v315
        %v674 = vunpack.c.h.b16 %v315
        %v675 = vunpack.c.l.b16 %v316
        %v676 = vunpack.c.h.b16 %v316
        %v677 = vunpack.c.l.b16 %v317
        %v678 = vunpack.c.h.b16 %v317
        %v679 = vunpack.c.l.b16 %v318
        %v680 = vunpack.c.h.b16 %v318
        %v681 = vunpack.c.l.b16 %v319
        %v682 = vunpack.c.h.b16 %v319
        %v683 = vunpack.c.l.b16 %v320
        %v684 = vunpack.c.h.b16 %v320
        %v685 = vunpack.c.l.b16 %v321
        %v686 = vunpack.c.h.b16 %v321
        %v687 = vunpack.c.l.b16 %v322
        %v688 = vunpack.c.h.b16 %v322
        %v689 = vunpack.c.l.b16 %v323
        %v690 = vunpack.c.h.b16 %v323
        %v691 = vunpack.c.l.b16 %v324
        %v692 = vunpack.c.h.b16 %v324
        %v693 = vunpack.c.l.b16 %v325
        %v694 = vunpack.c.h.b16 %v325
        %v695 = vunpack.c.l.b16 %v326
        %v696 = vunpack.c.h.b16 %v326
        %v697 = vunpack.c.l.b16 %v327
        %v698 = vunpack.c.h.b16 %v327
        %v699 = vunpack.c.l.b16 %v328
        %v700 = vunpack.c.h.b16 %v328
        %v701 = vunpack.c.l.b16 %v329
        %v702 = vunpack.c.h.b16 %v329
        %v703 = vunpack.c.l.b16 %v330
        %v704 = vunpack.c.h.b16 %v330
        %v705 = vunpack.c.l.b16 %v331
        %v706 = vunpack.c.h.b16 %v331
        %v707 = vunpack.c.l.b16 %v332
        %v708 = vunpack.c.h.b16 %v332
        %v709 = vunpack.c.l.b16 %v333
        %v710 = vunpack.c.h.b16 %v333
        %v711 = vunpack.c.l.b16 %v334
        %v712 = vunpack.c.h.b16 %v334
        %v713 = vunpack.c.l.b16 %v335
        %v714 = vunpack.c.h.b16 %v335
        %v715 = vunpack.c.l.b16 %v336
        %v716 = vunpack.c.h.b16 %v336
        %v717 = vunpack.c.l.b16 %v337
        %v718 = vunpack.c.h.b16 %v337
        %v719 = vunpack.c.l.b16 %v338
        %v720 = vunpack.c.h.b16 %v338
        %v721 = vunpack.c.l.b16 %v339
        %v722 = vunpack.c.h.b16 %v339
        %v723 = vunpack.c.l.b16 %v340
        %v724 = vunpack.c.h.b16 %v340
        %v725 = vunpack.c.l.b16 %v341
        %v726 = vunpack.c.h.b16 %v341
        %v727 = vunpack.c.l.b16 %v342
        %v728 = vunpack.c.h.b16 %v342
        %v729 = vunpack.c.l.b16 %v343
        %v730 = vunpack.c.h.b16 %v343
        %v731 = vunpack.c.l.b16 %v344
        %v732 = vunpack.c.h.b16 %v344
        %v733 = vunpack.c.l.b16 %v345
        %v734 = vunpack.c.h.b16 %v345
        %v735 = vunpack.c.l.b16 %v346
        %v736 = vunpack.c.h.b16 %v346
        %v737 = vunpack.c.l.b16 %v347
        %v738 = vunpack.c.h.b16 %v347
        %v739 = vunpack.c.l.b16 %v348
        %v740 = vunpack.c.h.b16 %v348
        %v741 = vunpack.c.l.b16 %v349
        %v742 = vunpack.c.h.b16 %v349
        %v743 = vunpack.c.l.b16 %v350
        %v744 = vunpack.c.h.b16 %v350
        %v745 = vpack.c.b16 %v497, %v489
        %v746 = vpack.c.b16 %v498, %v490
        %v747 = vpack.c.b16 %v499, %v491
        %v748 = vpack.c.b16 %v500, %v492
        %v749 = vpack.c.b16 %v501, %v493
        %v750 = vpack.c.b16 %v502, %v494
        %v751 = vpack.c.b16 %v503, %v495
        %v752 = vpack.c.b16 %v504, %v496
        %v753 = vpack.c.b16 %v513, %v505
        %v754 = vpack.c.b16 %v514, %v506
        %v755 = vpack.c.b16 %v515, %v507
        %v756 = vpack.c.b16 %v516, %v508
        %v757 = vpack.c.b16 %v517, %v509
        %v758 = vpack.c.b16 %v518, %v510
        %v759 = vpack.c.b16 %v519, %v511
        %v760 = vpack.c.b16 %v520, %v512
        %v761 = vpack.c.b16 %v529, %v521
        %v762 = vpack.c.b16 %v530, %v522
        %v763 = vpack.c.b16 %v531, %v523
        %v764 = vpack.c.b16 %v532, %v524
        %v765 = vpack.c.b16 %v533, %v525
        %v766 = vpack.c.b16 %v534, %v526
        %v767 = vpack.c.b16 %v535, %v527
        %v768 = vpack.c.b16 %v536, %v528
        %v769 = vpack.c.b16 %v545, %v537
        %v770 = vpack.c.b16 %v546, %v538
        %v771 = vpack.c.b16 %v547, %v539
        %v772 = vpack.c.b16 %v548, %v540
        %v773 = vpack.c.b16 %v549, %v541
        %v774 = vpack.c.b16 %v550, %v542
        %v775 = vpack.c.b16 %v551, %v543
        %v776 = vpack.c.b16 %v552, %v544
        %v777 = vpack.c.b16 %v561, %v553
        %v778 = vpack.c.b16 %v562, %v554
        %v779 = vpack.c.b16 %v563, %v555
        %v780 = vpack.c.b16 %v564, %v556
        %v781 = vpack.c.b16 %v565, %v557
        %v782 = vpack.c.b16 %v566, %v558
        %v783 = vpack.c.b16 %v567, %v559
        %v784 = vpack.c.b16 %v568, %v560
        %v785 = vpack.c.b16 %v577, %v569
        %v786 = vpack.c.b16 %v578, %v570
        %v787 = vpack.c.b16 %v579, %v571
        %v788 = vpack.c.b16 %v580, %v572
        %v789 = vpack.c.b16 %v581, %v573
        %v790 = vpack.c.b16 %v582, %v574
        %v791 = vpack.c.b16 %v583, %v575
        %v792 = vpack.c.b16 %v584, %v576
        %v793 = vpack.c.b16 %v593, %v585
        %v794 = vpack.c.b16 %v594, %v586
        %v795 = vpack.c.b16 %v595, %v587
        %v796 = vpack.c.b16 %v596, %v588
        %v797 = vpack.c.b16 %v597, %v589
        %v798 = vpack.c.b16 %v598, %v590
        %v799 = vpack.c.b16 %v599, %v591
        %v800 = vpack.c.b16 %v600, %v592
        %v801 = vpack.c.b16 %v609, %v601
        %v802 = vpack.c.b16 %v610, %v602
        %v803 = vpack.c.b16 %v611, %v603
        %v804 = vpack.c.b16 %v612, %v604
        %v805 = vpack.c.b16 %v613, %v605
        %v806 = vpack.c.b16 %v614, %v606
        %v807 = vpack.c.b16 %v615, %v607
        %v808 = vpack.c.b16 %v616, %v608
        %v809 = vpack.c.b16 %v625, %v617
        %v810 = vpack.c.b16 %v626, %v618
        %v811 = vpack.c.b16 %v627, %v619
        %v812 = vpack.c.b16 %v628, %v620
        %v813 = vpack.c.b16 %v629, %v621
        %v814 = vpack.c.b16 %v630, %v622
        %v815 = vpack.c.b16 %v631, %v623
        %v816 = vpack.c.b16 %v632, %v624
        %v817 = vpack.c.b16 %v641, %v633
        %v818 = vpack.c.b16 %v642, %v634
        %v819 = vpack.c.b16 %v643, %v635
        %v820 = vpack.c.b16 %v644, %v636
        %v821 = vpack.c.b16 %v645, %v637
        %v822 = vpack.c.b16 %v646, %v638
        %v823 = vpack.c.b16 %v647, %v639
        %v824 = vpack.c.b16 %v648, %v640
        %v825 = vpack.c.b16 %v657, %v649
        %v826 = vpack.c.b16 %v658, %v650
        %v827 = vpack.c.b16 %v659, %v651
        %v828 = vpack.c.b16 %v660, %v652
        %v829 = vpack.c.b16 %v661, %v653
        %v830 = vpack.c.b16 %v662, %v654
        %v831 = vpack.c.b16 %v663, %v655
        %v832 = vpack.c.b16 %v664, %v656
        %v833 = vpack.c.b16 %v673, %v665
        %v834 = vpack.c.b16 %v674, %v666
        %v835 = vpack.c.b16 %v675, %v667
        %v836 = vpack.c.b16 %v676, %v668
        %v837 = vpack.c.b16 %v677, %v669
        %v838 = vpack.c.b16 %v678, %v670
        %v839 = vpack.c.b16 %v679, %v671
        %v840 = vpack.c.b16 %v680, %v672
        %v841 = vpack.c.b16 %v689, %v681
        %v842 = vpack.c.b16 %v690, %v682
        %v843 = vpack.c.b16 %v691, %v683
        %v844 = vpack.c.b16 %v692, %v684
        %v845 = vpack.c.b16 %v693, %v685
        %v846 = vpack.c.b16 %v694, %v686
        %v847 = vpack.c.b16 %v695, %v687
        %v848 = vpack.c.b16 %v696, %v688
        %v849 = vpack.c.b16 %v705, %v697
        %v850 = vpack.c.b16 %v706, %v698
        %v851 = vpack.c.b16 %v707, %v699
        %v852 = vpack.c.b16 %v708, %v700
        %v853 = vpack.c.b16 %v709, %v701
        %v854 = vpack.c.b16 %v710, %v702
        %v855 = vpack.c.b16 %v711, %v703
        %v856 = vpack.c.b16 %v712, %v704
        %v857 = vpack.c.b16 %v721, %v713
        %v858 = vpack.c.b16 %v722, %v714
        %v859 = vpack.c.b16 %v723, %v715
        %v860 = vpack.c.b16 %v724, %v716
        %v861 = vpack.c.b16 %v725, %v717
        %v862 = vpack.c.b16 %v726, %v718
        %v863 = vpack.c.b16 %v727, %v719
        %v864 = vpack.c.b16 %v728, %v720
        %v865 = vpack.c.b16 %v737, %v729
        %v866 = vpack.c.b16 %v738, %v730
        %v867 = vpack.c.b16 %v739, %v731
        %v868 = vpack.c.b16 %v740, %v732
        %v869 = vpack.c.b16 %v741, %v733
        %v870 = vpack.c.b16 %v742, %v734
        %v871 = vpack.c.b16 %v743, %v735
        %v872 = vpack.c.b16 %v744, %v736
        %1001 = vmatprep.subr.bf16.mxu0 %v746
        %1002 = vmatpush1.bf16.msra.mxu0 %v745
        %1003 = vmatprep.subr.bf16.mxu0 %v754
        %1004 = vmatpush1.bf16.msra.mxu0 %v753
        %1005 = vmatprep.subr.bf16.mxu0 %v762
        %1006 = vmatpush1.bf16.msra.mxu0 %v761
        %1007 = vmatprep.subr.bf16.mxu0 %v770
        %1008 = vmatpush1.bf16.msra.mxu0 %v769
        %1009 = vmatprep.subr.bf16.mxu0 %v778
        %1010 = vmatpush1.bf16.msra.mxu0 %v777
        %1011 = vmatprep.subr.bf16.mxu0 %v786
        %1012 = vmatpush1.bf16.msra.mxu0 %v785
        %1013 = vmatprep.subr.bf16.mxu0 %v794
        %1014 = vmatpush1.bf16.msra.mxu0 %v793
        %1015 = vmatprep.subr.bf16.mxu0 %v802
        %1016 = vmatpush1.bf16.msra.mxu0 %v801
        %1017 = vmatprep.subr.bf16.mxu0 %v810
        %1018 = vmatpush1.bf16.msra.mxu0 %v809
        %1019 = vmatprep.subr.bf16.mxu0 %v818
        %1020 = vmatpush1.bf16.msra.mxu0 %v817
        %1021 = vmatprep.subr.bf16.mxu0 %v826
        %1022 = vmatpush1.bf16.msra.mxu0 %v825
        %1023 = vmatprep.subr.bf16.mxu0 %v834
        %1024 = vmatpush1.bf16.msra.mxu0 %v833
        %1025 = vmatprep.subr.bf16.mxu0 %v842
        %1026 = vmatpush1.bf16.msra.mxu0 %v841
        %1027 = vmatprep.subr.bf16.mxu0 %v850
        %1028 = vmatpush1.bf16.msra.mxu0 %v849
        %1029 = vmatprep.subr.bf16.mxu0 %v858
        %1030 = vmatpush1.bf16.msra.mxu0 %v857
        %1031 = vmatprep.subr.bf16.mxu0 %v866
        %1032 = vmatpush1.bf16.msra.mxu0 %v865
        %1033 = vmatprep.mubr.bf16.mxu0 %v358
        %1034 = vmatmul.mubr.bf16.gmra.mrb[0].mxu0 %v357
        %v1035 = vpop.f32.mrb[0].mxu0
        %v1036 = vadd.f32 0.0, %v1035
        %v1037 = vpop.f32.mrb[0].mxu0
        %v1038 = vadd.f32 0.0, %v1037
        %v1039 = vpop.f32.mrb[0].mxu0
        %v1040 = vadd.f32 0.0, %v1039
        %v1041 = vpop.f32.mrb[0].mxu0
        %v1042 = vadd.f32 0.0, %v1041
        %1043 = vdwg.mxu0
        %1044 = vmatprep.subr.bf16.mxu0 %v748
        %1045 = vmatpush1.bf16.msra.mxu0 %v747
        %1046 = vmatprep.subr.bf16.mxu0 %v756
        %1047 = vmatpush1.bf16.msra.mxu0 %v755
        %1048 = vmatprep.subr.bf16.mxu0 %v764
        %1049 = vmatpush1.bf16.msra.mxu0 %v763
        %1050 = vmatprep.subr.bf16.mxu0 %v772
        %1051 = vmatpush1.bf16.msra.mxu0 %v771
        %1052 = vmatprep.subr.bf16.mxu0 %v780
        %1053 = vmatpush1.bf16.msra.mxu0 %v779
        %1054 = vmatprep.subr.bf16.mxu0 %v788
        %1055 = vmatpush1.bf16.msra.mxu0 %v787
        %1056 = vmatprep.subr.bf16.mxu0 %v796
        %1057 = vmatpush1.bf16.msra.mxu0 %v795
        %1058 = vmatprep.subr.bf16.mxu0 %v804
        %1059 = vmatpush1.bf16.msra.mxu0 %v803
        %1060 = vmatprep.subr.bf16.mxu0 %v812
        %1061 = vmatpush1.bf16.msra.mxu0 %v811
        %1062 = vmatprep.subr.bf16.mxu0 %v820
        %1063 = vmatpush1.bf16.msra.mxu0 %v819
        %1064 = vmatprep.subr.bf16.mxu0 %v828
        %1065 = vmatpush1.bf16.msra.mxu0 %v827
        %1066 = vmatprep.subr.bf16.mxu0 %v836
        %1067 = vmatpush1.bf16.msra.mxu0 %v835
        %1068 = vmatprep.subr.bf16.mxu0 %v844
        %1069 = vmatpush1.bf16.msra.mxu0 %v843
        %1070 = vmatprep.subr.bf16.mxu0 %v852
        %1071 = vmatpush1.bf16.msra.mxu0 %v851
        %1072 = vmatprep.subr.bf16.mxu0 %v860
        %1073 = vmatpush1.bf16.msra.mxu0 %v859
        %1074 = vmatprep.subr.bf16.mxu0 %v868
        %1075 = vmatpush1.bf16.msra.mxu0 %v867
        %1076 = vmatprep.mubr.bf16.mxu0 %v358
        %1077 = vmatmul.mubr.bf16.gmra.mrb[0].mxu0 %v357
        %v1078 = vpop.f32.mrb[0].mxu0
        %v1079 = vadd.f32 0.0, %v1078
        %v1080 = vpop.f32.mrb[0].mxu0
        %v1081 = vadd.f32 0.0, %v1080
        %v1082 = vpop.f32.mrb[0].mxu0
        %v1083 = vadd.f32 0.0, %v1082
        %v1084 = vpop.f32.mrb[0].mxu0
        %v1085 = vadd.f32 0.0, %v1084
        %1086 = vdwg.mxu0
        %1087 = vmatprep.subr.bf16.mxu0 %v750
        %1088 = vmatpush1.bf16.msra.mxu0 %v749
        %1089 = vmatprep.subr.bf16.mxu0 %v758
        %1090 = vmatpush1.bf16.msra.mxu0 %v757
        %1091 = vmatprep.subr.bf16.mxu0 %v766
        %1092 = vmatpush1.bf16.msra.mxu0 %v765
        %1093 = vmatprep.subr.bf16.mxu0 %v774
        %1094 = vmatpush1.bf16.msra.mxu0 %v773
        %1095 = vmatprep.subr.bf16.mxu0 %v782
        %1096 = vmatpush1.bf16.msra.mxu0 %v781
        %1097 = vmatprep.subr.bf16.mxu0 %v790
        %1098 = vmatpush1.bf16.msra.mxu0 %v789
        %1099 = vmatprep.subr.bf16.mxu0 %v798
        %1100 = vmatpush1.bf16.msra.mxu0 %v797
        %1101 = vmatprep.subr.bf16.mxu0 %v806
        %1102 = vmatpush1.bf16.msra.mxu0 %v805
        %1103 = vmatprep.subr.bf16.mxu0 %v814
        %1104 = vmatpush1.bf16.msra.mxu0 %v813
        %1105 = vmatprep.subr.bf16.mxu0 %v822
        %1106 = vmatpush1.bf16.msra.mxu0 %v821
        %1107 = vmatprep.subr.bf16.mxu0 %v830
        %1108 = vmatpush1.bf16.msra.mxu0 %v829
        %1109 = vmatprep.subr.bf16.mxu0 %v838
        %1110 = vmatpush1.bf16.msra.mxu0 %v837
        %1111 = vmatprep.subr.bf16.mxu0 %v846
        %1112 = vmatpush1.bf16.msra.mxu0 %v845
        %1113 = vmatprep.subr.bf16.mxu0 %v854
        %1114 = vmatpush1.bf16.msra.mxu0 %v853
        %1115 = vmatprep.subr.bf16.mxu0 %v862
        %1116 = vmatpush1.bf16.msra.mxu0 %v861
        %1117 = vmatprep.subr.bf16.mxu0 %v870
        %1118 = vmatpush1.bf16.msra.mxu0 %v869
        %1119 = vmatprep.mubr.bf16.mxu0 %v358
        %1120 = vmatmul.mubr.bf16.gmra.mrb[0].mxu0 %v357
        %v1121 = vpop.f32.mrb[0].mxu0
        %v1122 = vadd.f32 0.0, %v1121
        %v1123 = vpop.f32.mrb[0].mxu0
        %v1124 = vadd.f32 0.0, %v1123
        %v1125 = vpop.f32.mrb[0].mxu0
        %v1126 = vadd.f32 0.0, %v1125
        %v1127 = vpop.f32.mrb[0].mxu0
        %v1128 = vadd.f32 0.0, %v1127
        %1129 = vdwg.mxu0
        %1130 = vmatprep.subr.bf16.mxu0 %v752
        %1131 = vmatpush1.bf16.msra.mxu0 %v751
        %1132 = vmatprep.subr.bf16.mxu0 %v760
        %1133 = vmatpush1.bf16.msra.mxu0 %v759
        %1134 = vmatprep.subr.bf16.mxu0 %v768
        %1135 = vmatpush1.bf16.msra.mxu0 %v767
        %1136 = vmatprep.subr.bf16.mxu0 %v776
        %1137 = vmatpush1.bf16.msra.mxu0 %v775
        %1138 = vmatprep.subr.bf16.mxu0 %v784
        %1139 = vmatpush1.bf16.msra.mxu0 %v783
        %1140 = vmatprep.subr.bf16.mxu0 %v792
        %1141 = vmatpush1.bf16.msra.mxu0 %v791
        %1142 = vmatprep.subr.bf16.mxu0 %v800
        %1143 = vmatpush1.bf16.msra.mxu0 %v799
        %1144 = vmatprep.subr.bf16.mxu0 %v808
        %1145 = vmatpush1.bf16.msra.mxu0 %v807
        %1146 = vmatprep.subr.bf16.mxu0 %v816
        %1147 = vmatpush1.bf16.msra.mxu0 %v815
        %1148 = vmatprep.subr.bf16.mxu0 %v824
        %1149 = vmatpush1.bf16.msra.mxu0 %v823
        %1150 = vmatprep.subr.bf16.mxu0 %v832
        %1151 = vmatpush1.bf16.msra.mxu0 %v831
        %1152 = vmatprep.subr.bf16.mxu0 %v840
        %1153 = vmatpush1.bf16.msra.mxu0 %v839
        %1154 = vmatprep.subr.bf16.mxu0 %v848
        %1155 = vmatpush1.bf16.msra.mxu0 %v847
        %1156 = vmatprep.subr.bf16.mxu0 %v856
        %1157 = vmatpush1.bf16.msra.mxu0 %v855
        %1158 = vmatprep.subr.bf16.mxu0 %v864
        %1159 = vmatpush1.bf16.msra.mxu0 %v863
        %1160 = vmatprep.subr.bf16.mxu0 %v872
        %1161 = vmatpush1.bf16.msra.mxu0 %v871
        %1162 = vmatprep.mubr.bf16.mxu0 %v358
        %1163 = vmatmul.mubr.bf16.gmra.mrb[0].mxu0 %v357
        %v1164 = vpop.f32.mrb[0].mxu0
        %v1165 = vadd.f32 0.0, %v1164
        %v1166 = vpop.f32.mrb[0].mxu0
        %v1167 = vadd.f32 0.0, %v1166
        %v1168 = vpop.f32.mrb[0].mxu0
        %v1169 = vadd.f32 0.0, %v1168
        %v1170 = vpop.f32.mrb[0].mxu0
        %v1171 = vadd.f32 0.0, %v1170
        %1172 = vdwg.mxu0
        %v1173 = vmul.f32 %v1036, %v1122
        %v1174 = vmul.f32 %v1038, %v1124
        %v1175 = vmul.f32 %v1079, %v1165
        %v1176 = vmul.f32 %v1081, %v1167
        %v1177 = vmul.f32 %v1040, %v1126
        %v1178 = vmul.f32 %v1042, %v1128
        %v1179 = vmul.f32 %v1083, %v1169
        %v1180 = vmul.f32 %v1085, %v1171
        %v1181 = vld [vmem:[#allocation7] sm:$0xff]
        %v1182 = vld [vmem:[#allocation7 + $0x8] sm:$0xff]
        %v1183 = vld [vmem:[#allocation7 + $0x10] sm:$0xff]
        %v1184 = vld [vmem:[#allocation7 + $0x18] sm:$0xff]
        %v1185 = vld [vmem:[#allocation7 + $0x20] sm:$0xff]
        %v1186 = vld [vmem:[#allocation7 + $0x28] sm:$0xff]
        %v1187 = vld [vmem:[#allocation7 + $0x30] sm:$0xff]
        %v1188 = vld [vmem:[#allocation7 + $0x38] sm:$0xff]
        %v1189 = vld [vmem:[#allocation7 + $0x40] sm:$0xff]
        %v1190 = vld [vmem:[#allocation7 + $0x48] sm:$0xff]
        %v1191 = vld [vmem:[#allocation7 + $0x50] sm:$0xff]
        %v1192 = vld [vmem:[#allocation7 + $0x58] sm:$0xff]
        %v1193 = vld [vmem:[#allocation7 + $0x60] sm:$0xff]
        %v1194 = vld [vmem:[#allocation7 + $0x68] sm:$0xff]
        %v1195 = vld [vmem:[#allocation7 + $0x70] sm:$0xff]
        %v1196 = vld [vmem:[#allocation7 + $0x78] sm:$0xff]
        %v1197 = vld [vmem:[#allocation7 + $0x80] sm:$0xff]
        %v1198 = vld [vmem:[#allocation7 + $0x88] sm:$0xff]
        %v1199 = vld [vmem:[#allocation7 + $0x90] sm:$0xff]
        %v1200 = vld [vmem:[#allocation7 + $0x98] sm:$0xff]
        %v1201 = vld [vmem:[#allocation7 + $0xa0] sm:$0xff]
        %v1202 = vld [vmem:[#allocation7 + $0xa8] sm:$0xff]
        %v1203 = vld [vmem:[#allocation7 + $0xb0] sm:$0xff]
        %v1204 = vld [vmem:[#allocation7 + $0xb8] sm:$0xff]
        %v1205 = vld [vmem:[#allocation7 + $0xc0] sm:$0xff]
        %v1206 = vld [vmem:[#allocation7 + $0xc8] sm:$0xff]
        %v1207 = vld [vmem:[#allocation7 + $0xd0] sm:$0xff]
        %v1208 = vld [vmem:[#allocation7 + $0xd8] sm:$0xff]
        %v1209 = vld [vmem:[#allocation7 + $0xe0] sm:$0xff]
        %v1210 = vld [vmem:[#allocation7 + $0xe8] sm:$0xff]
        %v1211 = vld [vmem:[#allocation7 + $0xf0] sm:$0xff]
        %v1212 = vld [vmem:[#allocation7 + $0xf8] sm:$0xff]
        %v1213 = vld [vmem:[#allocation7 + $0x100] sm:$0xff]
        %v1214 = vld [vmem:[#allocation7 + $0x108] sm:$0xff]
        %v1215 = vld [vmem:[#allocation7 + $0x110] sm:$0xff]
        %v1216 = vld [vmem:[#allocation7 + $0x118] sm:$0xff]
        %v1217 = vld [vmem:[#allocation7 + $0x120] sm:$0xff]
        %v1218 = vld [vmem:[#allocation7 + $0x128] sm:$0xff]
        %v1219 = vld [vmem:[#allocation7 + $0x130] sm:$0xff]
        %v1220 = vld [vmem:[#allocation7 + $0x138] sm:$0xff]
        %v1221 = vld [vmem:[#allocation7 + $0x140] sm:$0xff]
        %v1222 = vld [vmem:[#allocation7 + $0x148] sm:$0xff]
        %v1223 = vld [vmem:[#allocation7 + $0x150] sm:$0xff]
        %v1224 = vld [vmem:[#allocation7 + $0x158] sm:$0xff]
        %v1225 = vld [vmem:[#allocation7 + $0x160] sm:$0xff]
        %v1226 = vld [vmem:[#allocation7 + $0x168] sm:$0xff]
        %v1227 = vld [vmem:[#allocation7 + $0x170] sm:$0xff]
        %v1228 = vld [vmem:[#allocation7 + $0x178] sm:$0xff]
        %v1229 = vld [vmem:[#allocation7 + $0x180] sm:$0xff]
        %v1230 = vld [vmem:[#allocation7 + $0x188] sm:$0xff]
        %v1231 = vld [vmem:[#allocation7 + $0x190] sm:$0xff]
        %v1232 = vld [vmem:[#allocation7 + $0x198] sm:$0xff]
        %v1233 = vld [vmem:[#allocation7 + $0x1a0] sm:$0xff]
        %v1234 = vld [vmem:[#allocation7 + $0x1a8] sm:$0xff]
        %v1235 = vld [vmem:[#allocation7 + $0x1b0] sm:$0xff]
        %v1236 = vld [vmem:[#allocation7 + $0x1b8] sm:$0xff]
        %v1237 = vld [vmem:[#allocation7 + $0x1c0] sm:$0xff]
        %v1238 = vld [vmem:[#allocation7 + $0x1c8] sm:$0xff]
        %v1239 = vld [vmem:[#allocation7 + $0x1d0] sm:$0xff]
        %v1240 = vld [vmem:[#allocation7 + $0x1d8] sm:$0xff]
        %v1241 = vld [vmem:[#allocation7 + $0x1e0] sm:$0xff]
        %v1242 = vld [vmem:[#allocation7 + $0x1e8] sm:$0xff]
        %v1243 = vld [vmem:[#allocation7 + $0x1f0] sm:$0xff]
        %v1244 = vld [vmem:[#allocation7 + $0x1f8] sm:$0xff]
        %1245 = vmatprep.subr.mxu0 0.0
        %1246 = vmatpush1.msra.mxu0 %v1181
        %1247 = vmatprep.subr.mxu0 0.0
        %1248 = vmatpush1.msra.mxu0 %v1182
        %1249 = vmatprep.subr.mxu0 0.0
        %1250 = vmatpush1.msra.mxu0 %v1183
        %1251 = vmatprep.subr.mxu0 0.0
        %1252 = vmatpush1.msra.mxu0 %v1184
        %1253 = vmatprep.subr.mxu0 0.0
        %1254 = vmatpush1.msra.mxu0 %v1185
        %1255 = vmatprep.subr.mxu0 0.0
        %1256 = vmatpush1.msra.mxu0 %v1186
        %1257 = vmatprep.subr.mxu0 0.0
        %1258 = vmatpush1.msra.mxu0 %v1187
        %1259 = vmatprep.subr.mxu0 0.0
        %1260 = vmatpush1.msra.mxu0 %v1188
        %1261 = vmatprep.subr.mxu0 0.0
        %1262 = vmatpush1.msra.mxu0 %v1189
        %1263 = vmatprep.subr.mxu0 0.0
        %1264 = vmatpush1.msra.mxu0 %v1190
        %1265 = vmatprep.subr.mxu0 0.0
        %1266 = vmatpush1.msra.mxu0 %v1191
        %1267 = vmatprep.subr.mxu0 0.0
        %1268 = vmatpush1.msra.mxu0 %v1192
        %1269 = vmatprep.subr.mxu0 0.0
        %1270 = vmatpush1.msra.mxu0 %v1193
        %1271 = vmatprep.subr.mxu0 0.0
        %1272 = vmatpush1.msra.mxu0 %v1194
        %1273 = vmatprep.subr.mxu0 0.0
        %1274 = vmatpush1.msra.mxu0 %v1195
        %1275 = vmatprep.subr.mxu0 0.0
        %1276 = vmatpush1.msra.mxu0 %v1196
        %1277 = vmatprep.subr.mxu0 0.0
        %1278 = vmatpush1.msra.mxu0 %v1197
        %1279 = vmatprep.subr.mxu0 0.0
        %1280 = vmatpush1.msra.mxu0 %v1198
        %1281 = vmatprep.subr.mxu0 0.0
        %1282 = vmatpush1.msra.mxu0 %v1199
        %1283 = vmatprep.subr.mxu0 0.0
        %1284 = vmatpush1.msra.mxu0 %v1200
        %1285 = vmatprep.subr.mxu0 0.0
        %1286 = vmatpush1.msra.mxu0 %v1201
        %1287 = vmatprep.subr.mxu0 0.0
        %1288 = vmatpush1.msra.mxu0 %v1202
        %1289 = vmatprep.subr.mxu0 0.0
        %1290 = vmatpush1.msra.mxu0 %v1203
        %1291 = vmatprep.subr.mxu0 0.0
        %1292 = vmatpush1.msra.mxu0 %v1204
        %1293 = vmatprep.subr.mxu0 0.0
        %1294 = vmatpush1.msra.mxu0 %v1205
        %1295 = vmatprep.subr.mxu0 0.0
        %1296 = vmatpush1.msra.mxu0 %v1206
        %1297 = vmatprep.subr.mxu0 0.0
        %1298 = vmatpush1.msra.mxu0 %v1207
        %1299 = vmatprep.subr.mxu0 0.0
        %1300 = vmatpush1.msra.mxu0 %v1208
        %1301 = vmatprep.subr.mxu0 0.0
        %1302 = vmatpush1.msra.mxu0 %v1209
        %1303 = vmatprep.subr.mxu0 0.0
        %1304 = vmatpush1.msra.mxu0 %v1210
        %1305 = vmatprep.subr.mxu0 0.0
        %1306 = vmatpush1.msra.mxu0 %v1211
        %1307 = vmatprep.subr.mxu0 0.0
        %1308 = vmatpush1.msra.mxu0 %v1212
        %1309 = vmatprep.mubr.f32.mxu0 %v1174
        %1310 = vmatmul.mubr.f32.gmra.mrb[0].mxu0 %v1173
        %v1311 = vpop.f32.mrb[0].mxu0
        %v1312 = vadd.f32 0.0, %v1311
        %v1313 = vpop.f32.mrb[0].mxu0
        %1314 = vmatprep.mubr.f32.mxu0 %v1178
        %1315 = vmatmul.mubr.f32.gmra.mrb[0].mxu0 %v1177
        %v1316 = vpop.f32.mrb[0].mxu0
        %v1317 = vadd.f32 0.0, %v1316
        %v1318 = vpop.f32.mrb[0].mxu0
        %1319 = vdwg.mxu0
        %1320 = vmatprep.subr.mxu0 0.0
        %1321 = vmatpush1.msra.mxu0 %v1213
        %1322 = vmatprep.subr.mxu0 0.0
        %1323 = vmatpush1.msra.mxu0 %v1214
        %1324 = vmatprep.subr.mxu0 0.0
        %1325 = vmatpush1.msra.mxu0 %v1215
        %1326 = vmatprep.subr.mxu0 0.0
        %1327 = vmatpush1.msra.mxu0 %v1216
        %1328 = vmatprep.subr.mxu0 0.0
        %1329 = vmatpush1.msra.mxu0 %v1217
        %1330 = vmatprep.subr.mxu0 0.0
        %1331 = vmatpush1.msra.mxu0 %v1218
        %1332 = vmatprep.subr.mxu0 0.0
        %1333 = vmatpush1.msra.mxu0 %v1219
        %1334 = vmatprep.subr.mxu0 0.0
        %1335 = vmatpush1.msra.mxu0 %v1220
        %1336 = vmatprep.subr.mxu0 0.0
        %1337 = vmatpush1.msra.mxu0 %v1221
        %1338 = vmatprep.subr.mxu0 0.0
        %1339 = vmatpush1.msra.mxu0 %v1222
        %1340 = vmatprep.subr.mxu0 0.0
        %1341 = vmatpush1.msra.mxu0 %v1223
        %1342 = vmatprep.subr.mxu0 0.0
        %1343 = vmatpush1.msra.mxu0 %v1224
        %1344 = vmatprep.subr.mxu0 0.0
        %1345 = vmatpush1.msra.mxu0 %v1225
        %1346 = vmatprep.subr.mxu0 0.0
        %1347 = vmatpush1.msra.mxu0 %v1226
        %1348 = vmatprep.subr.mxu0 0.0
        %1349 = vmatpush1.msra.mxu0 %v1227
        %1350 = vmatprep.subr.mxu0 0.0
        %1351 = vmatpush1.msra.mxu0 %v1228
        %1352 = vmatprep.subr.mxu0 0.0
        %1353 = vmatpush1.msra.mxu0 %v1229
        %1354 = vmatprep.subr.mxu0 0.0
        %1355 = vmatpush1.msra.mxu0 %v1230
        %1356 = vmatprep.subr.mxu0 0.0
        %1357 = vmatpush1.msra.mxu0 %v1231
        %1358 = vmatprep.subr.mxu0 0.0
        %1359 = vmatpush1.msra.mxu0 %v1232
        %1360 = vmatprep.subr.mxu0 0.0
        %1361 = vmatpush1.msra.mxu0 %v1233
        %1362 = vmatprep.subr.mxu0 0.0
        %1363 = vmatpush1.msra.mxu0 %v1234
        %1364 = vmatprep.subr.mxu0 0.0
        %1365 = vmatpush1.msra.mxu0 %v1235
        %1366 = vmatprep.subr.mxu0 0.0
        %1367 = vmatpush1.msra.mxu0 %v1236
        %1368 = vmatprep.subr.mxu0 0.0
        %1369 = vmatpush1.msra.mxu0 %v1237
        %1370 = vmatprep.subr.mxu0 0.0
        %1371 = vmatpush1.msra.mxu0 %v1238
        %1372 = vmatprep.subr.mxu0 0.0
        %1373 = vmatpush1.msra.mxu0 %v1239
        %1374 = vmatprep.subr.mxu0 0.0
        %1375 = vmatpush1.msra.mxu0 %v1240
        %1376 = vmatprep.subr.mxu0 0.0
        %1377 = vmatpush1.msra.mxu0 %v1241
        %1378 = vmatprep.subr.mxu0 0.0
        %1379 = vmatpush1.msra.mxu0 %v1242
        %1380 = vmatprep.subr.mxu0 0.0
        %1381 = vmatpush1.msra.mxu0 %v1243
        %1382 = vmatprep.subr.mxu0 0.0
        %1383 = vmatpush1.msra.mxu0 %v1244
        %1384 = vmatprep.mubr.f32.mxu0 %v1176
        %1385 = vmatmul.mubr.f32.gmra.mrb[0].mxu0 %v1175
        %v1386 = vpop.f32.mrb[0].mxu0
        %v1387 = vadd.f32 %v1312, %v1386
        %v1388 = vpop.f32.mrb[0].mxu0
        %1389 = vmatprep.mubr.f32.mxu0 %v1180
        %1390 = vmatmul.mubr.f32.gmra.mrb[0].mxu0 %v1179
        %v1391 = vpop.f32.mrb[0].mxu0
        %v1392 = vadd.f32 %v1317, %v1391
        %v1393 = vpop.f32.mrb[0].mxu0
        %1394 = vdwg.mxu0
        %1395 = vst [vmem:[%s218] sm:$0xff] %v1387
        %1396 = vst [vmem:[%s218 + $0x8] sm:$0xff] %v1392
        %s1397 = sand.u32 %s97, 1
        %s1398 = scalar_lea.sflag [#allocation4], %s1397
        %s1399 = sand.u32 %s97, 1
        %s1400 = smul.addr %s1399, 16
        %s1401 = scalar_lea.vmem [#allocation8], %s1400
        // Predicated region
        $region45: #{tpu_custom_call.1} parent=31 // pred_check
          %p1402 = pneg %p107
        $region46: #{tpu_custom_call.1} parent=31 // pred_check_branch
          %1404 = sbr.rel (%p1402) target = $region48
        $region47: #{tpu_custom_call.1} parent=31 // pred_region
          %s1405 = smul.u32 2, %s21
          %s1407 = ssub.s32 256, 256
          %1408 = vsyncadd %s1398, %s1407
          %s1409 = smul.addr %s1405, 128
          %s1410 = scalar_lea.hbm %s3, %s1409
          %s1411 = sshll.u32 %s1401, 4
          %s1412 = int_to_ptr.vmem [resolvable:$true] %s1411
          %1417 = dma.vmem_to_hbm [thread:$0]  %s1412, 256, %s1410, %s1398, 128, 128, 8
        $region48: #{tpu_custom_call.1} parent=31 // pred_fallthru
          _
      $region32: #{tpu_custom_call.1} parent=5 // pred_fallthru
        _
      %p1418 = scmp.le.s32.totalorder 2, %s16
      // Predicated region
      $region49: #{tpu_custom_call.1} parent=5 // pred_check
        %p1419 = pneg %p1418
      $region50: #{tpu_custom_call.1} parent=5 // pred_check_branch
        %1421 = sbr.rel (%p1419) target = $region52
      $region51: #{tpu_custom_call.1} parent=5 // pred_region
        %s1422 = ssub.s32 %s16, 2
        // Predicated region
        $region53: #{tpu_custom_call.1} parent=51 // pred_check
          %p1423 = pneg %p113
        $region54: #{tpu_custom_call.1} parent=51 // pred_check_branch
          %1425 = sbr.rel (%p1423) target = $region56
        $region55: #{tpu_custom_call.1} parent=51 // pred_region
          %s1426 = sand.u32 %s98, 1
          %s1427 = scalar_lea.sflag [#allocation4], %s1426
          %s1428 = sand.u32 %s98, 1
          %s1429 = smul.addr %s1428, 16
          %s1430 = scalar_lea.vmem [#allocation8], %s1429
          %1431 = dma.done %s1427, 256
        $region56: #{tpu_custom_call.1} parent=51 // pred_fallthru
          _
      $region52: #{tpu_custom_call.1} parent=5 // pred_fallthru
        _
    $region6: #{tpu_custom_call.1} parent=1 // loop_footer
      %s20 = sadd.s32 1, %s16
    $region7: #{tpu_custom_call.1} parent=1 // loop_footer_branch
      %15 = sbr.rel target = $region3
    $region8: #{tpu_custom_call.1} parent=1 // loop_exit
      _
    %1432 = vsyncpa [#allocation3], 1
    %s1433 = scalar_lea.sflag [#allocation3], 1
    %1434 = vsyncpa %s1433, 1
    %1435 = vsyncpa [#allocation6], 1
    %1436 = vsyncpa [#allocation4], 1
    %s1437 = scalar_lea.sflag [#allocation4], 1
    %1438 = vsyncpa %s1437, 1

</llo_original>
